<compile_context>
chip_gen: v7x
topology: tpu7x:2x2x1
jax: 0.10.0
libtpu: 0.0.40
codegen_flags: <defaults>
</compile_context>

<pallas_src>
import math
import functools

import jax
import jax.numpy as jnp
from jax import lax
from jax.experimental import pallas as pl
from jax.experimental.pallas import tpu as pltpu


_SUBLANE = 8
_LANE = 128


def _round_up(x, m):
    return ((x + m - 1) // m) * m


# ---------------------------------------------------------------------------
# Pallas kernel: im2col into VMEM scratch + ONE MXU contraction for the whole
# batch.  All patch / output stores are full (8-sublane, 128-lane)-aligned.
# ---------------------------------------------------------------------------
def _conv_im2col_kernel(x_ref, w_ref, b_ref, o_ref, patch_ref, *,
                        N, Cin_pad, KH, KW, dh, dw, Wp, P_pad):
    # x_ref    : (N, Cin_pad, L)        row-flattened zero-padded inputs
    # w_ref    : (Cout, K)              K = KH*KW*Cin_pad, tap-major weights
    # b_ref    : (Cout, 1)              f32 bias
    # o_ref    : (N, Cout, P_pad)       dense stride-1 outputs, lane-padded
    # patch_ref: (K, N*P_pad)           im2col matrix in VMEM

    # Build the im2col matrix: each (tap, batch) block is a contiguous
    # lane-dim slice of the flattened input.  All indices are static Python
    # ints -> aligned, unmasked stores (Cin_pad multiple of 8, P_pad multiple
    # of 128, n*P_pad multiple of 128).
    for n in range(N):
        col0 = n * P_pad
        for t in range(KH * KW):
            kh, kw = divmod(t, KW)
            off = kh * dh * Wp + kw * dw                     # static offset
            patch_ref[pl.ds(t * Cin_pad, Cin_pad), pl.ds(col0, P_pad)] = \
                x_ref[n, :, pl.ds(off, P_pad)]

    # Single contraction for the whole batch: (Cout, K) @ (K, N*P_pad),
    # f32 accumulate, + bias broadcast over lanes.
    acc = jnp.dot(w_ref[...], patch_ref[...],
                  preferred_element_type=jnp.float32)
    acc = acc + b_ref[...]

    # Scatter back per batch element (static slices, full-lane stores).
    for n in range(N):
        o_ref[n, :, :] = acc[:, n * P_pad:(n + 1) * P_pad].astype(o_ref.dtype)


# ---------------------------------------------------------------------------
# One-time parameter layout prep (hoisted out of the per-call path):
#   w2[o, t*Cin_pad + c] = weight[o, c, kh, kw]  (zero for c >= Cin)
# ---------------------------------------------------------------------------
def prepare_params(weight_oihw, bias):
    Cout, Cin, KH, KW = weight_oihw.shape
    Cin_pad = _round_up(Cin, _SUBLANE)
    w_p = jnp.pad(weight_oihw, ((0, 0), (0, Cin_pad - Cin), (0, 0), (0, 0)))
    w2 = jnp.transpose(w_p, (0, 2, 3, 1)).reshape(Cout, KH * KW * Cin_pad)
    b2 = bias.reshape(Cout, 1).astype(jnp.float32)
    return w2, b2


# ---------------------------------------------------------------------------
# Wrapper reproducing Conv2d_with_padding.conv2d_same_padding semantics.
# ---------------------------------------------------------------------------
@functools.partial(jax.jit,
                   static_argnames=("kernel_size", "stride", "dilation", "groups"))
def conv2d_same_padding(x_nchw, w2, b2, *, kernel_size, stride=(1, 1),
                        dilation=(1, 1), groups=1):
    assert groups == 1  # TODO(synk): grouped conv not implemented in the kernel
    N, Cin, H, W = x_nchw.shape
    KH, KW = kernel_size
    Cout, K = w2.shape
    Cin_pad = K // (KH * KW)
    sh, sw = stride
    dh, dw = dilation

    # --- exact reproduction of the PyTorch padding arithmetic --------------
    # (column padding deliberately copied from the ROW statistics -- quirk;
    #  diverges from true SAME padding for non-square inputs / kernels /
    #  strides, exactly like the original module.)
    out_rows = (H + sh - 1) // sh
    padding_rows = max(0, (out_rows - 1) * sh + (KH - 1) * dh + 1 - H)
    padding_cols = padding_rows          # quirk
    rows_odd = padding_rows % 2 != 0
    cols_odd = rows_odd                  # quirk

    pad_top = padding_rows // 2
    pad_bottom = padding_rows // 2 + int(rows_odd)
    pad_left = padding_cols // 2
    pad_right = padding_cols // 2 + int(cols_odd)

    Hp = H + pad_top + pad_bottom
    Wp = W + pad_left + pad_right
    eff_kh = (KH - 1) * dh + 1
    eff_kw = (KW - 1) * dw + 1
    OH = (Hp - eff_kh) // sh + 1          # strided output dims (module semantics)
    OW = (Wp - eff_kw) // sw + 1
    OH1 = Hp - eff_kh + 1                 # dense stride-1 output rows (kernel)
    P = OH1 * Wp                          # valid lane-dense spatial extent
    P_pad = _round_up(P, _LANE)           # lane-padded extent (unmasked stores)

    # Enough trailing zero rows so that every tap slice off + P_pad stays
    # inside the flattened image (VMEM reads are not bounds-checked).
    max_off = (KH - 1) * dh * Wp + (KW - 1) * dw
    extra = max(0, max_off + P_pad - Hp * Wp)
    extra_rows = -(-extra // Wp)          # cdiv
    L = (Hp + extra_rows) * Wp

    # Zero-pad: channels -> Cin_pad, spatial -> padded + trailing zero rows.
    x_pad = jnp.pad(x_nchw, ((0, 0), (0, Cin_pad - Cin),
                             (pad_top, pad_bottom + extra_rows),
                             (pad_left, pad_right)))
    x_flat = x_pad.reshape(N, Cin_pad, L)       # contiguous reshape, stays NCHW

    # Match operand dtypes for the MXU (accumulation stays f32 via
    # preferred_element_type inside the kernel).
    w2 = w2.astype(x_nchw.dtype)

    kernel = functools.partial(_conv_im2col_kernel, N=N, Cin_pad=Cin_pad,
                               KH=KH, KW=KW, dh=dh, dw=dw, Wp=Wp, P_pad=P_pad)

    out_flat = pl.pallas_call(
        kernel,
        out_shape=jax.ShapeDtypeStruct((N, Cout, P_pad), x_nchw.dtype),
        grid=(1,),                                # whole batch in one step
        in_specs=[
            pl.BlockSpec((N, Cin_pad, L), lambda i: (0, 0, 0)),
            pl.BlockSpec((Cout, K), lambda i: (0, 0)),
            pl.BlockSpec((Cout, 1), lambda i: (0, 0)),
        ],
        out_specs=pl.BlockSpec((N, Cout, P_pad), lambda i: (0, 0, 0)),
        scratch_shapes=[pltpu.VMEM((K, N * P_pad), x_nchw.dtype)],
        compiler_params=pltpu.CompilerParams(
            dimension_semantics=("arbitrary",)),
    )(x_flat, w2, b2)

    # Un-flatten: valid columns are [0, P); each row of length Wp holds the
    # dense stride-1 outputs.  Subsample for stride > 1 (pure slice at s=1).
    out_full = out_flat[:, :, :P].reshape(N, Cout, OH1, Wp)
    out = out_full[:, :, ::sh, ::sw][:, :, :OH, :OW]
    return out                                            # NCHW


# ---------------------------------------------------------------------------
# Deterministic parameter init mirroring _ConvNd.reset_parameters
# (kaiming_uniform_(a=sqrt(5)) => U(-1/sqrt(fan_in), 1/sqrt(fan_in)))
# ---------------------------------------------------------------------------
def init_params(key, in_channels, out_channels, kernel_size):
    KH, KW = kernel_size
    fan_in = in_channels * KH * KW
    bound = 1.0 / math.sqrt(fan_in)
    kw_, kb_ = jax.random.split(key)
    weight = jax.random.uniform(kw_, (out_channels, in_channels, KH, KW),
                                jnp.float32, -bound, bound)
    bias = jax.random.uniform(kb_, (out_channels,), jnp.float32, -bound, bound)
    return weight, bias


if __name__ == "__main__":
    key = jax.random.PRNGKey(0)
    k_x, k_p = jax.random.split(key)

    # Module config: Conv2d_with_padding(4, 8, kernel_size=3, stride=1)
    in_channels, out_channels, kernel_size = 4, 8, (3, 3)
    stride, dilation = (1, 1), (1, 1)

    x = jax.random.normal(k_x, (2, in_channels, 16, 16), jnp.float32)  # NCHW
    weight, bias = init_params(k_p, in_channels, out_channels, kernel_size)

    # One-time layout prep (hoisted out of the per-call path).
    w2, b2 = prepare_params(weight, bias)

    out = conv2d_same_padding(x, w2, b2, kernel_size=kernel_size,
                              stride=stride, dilation=dilation)
    out = jax.block_until_ready(out)

    # Reference check against XLA conv with the same (quirky) padding arithmetic.
    H = x.shape[2]
    KH = kernel_size[0]
    out_rows = (H + stride[0] - 1) // stride[0]
    pr = max(0, (out_rows - 1) * stride[0] + (KH - 1) * dilation[0] + 1 - H)
    odd = int(pr % 2 != 0)
    ref = lax.conv_general_dilated(
        x, weight, window_strides=stride,
        padding=((pr // 2, pr // 2 + odd), (pr // 2, pr // 2 + odd)),
        rhs_dilation=dilation,
        dimension_numbers=("NCHW", "OIHW", "NCHW"),
    ) + bias.reshape(1, -1, 1, 1)
    assert out.shape == ref.shape, (out.shape, ref.shape)
    assert jnp.allclose(out, ref, rtol=1e-4, atol=1e-5)

    print("KERNEL_OK")
</pallas_src>

<mosaic_0001>
module attributes {stable_mosaic.version = 11 : i64} {
  func.func @_conv_im2col_kernel(%arg0: i32, %arg1: memref<2x8x432xf32, #tpu.memory_space<vmem>>, %arg2: memref<8x72xf32, #tpu.memory_space<vmem>>, %arg3: memref<8x1xf32, #tpu.memory_space<vmem>>, %arg4: memref<2x8x384xf32, #tpu.memory_space<vmem>>, %arg5: memref<72x768xf32, #tpu.memory_space<vmem>>) attributes {dimension_semantics = [#tpu.dimension_semantics<arbitrary>], iteration_bounds = array<i64: 1>, scalar_prefetch = 0 : i64, scratch_operands = 1 : i64, tpu.core_type = #tpu.core_type<tc>, window_params = [{pipeline_mode = #tpu.pipeline_mode<synchronous>, transform_indices = @transform_0, window_bounds = array<i64: 2, 8, 432>}, {pipeline_mode = #tpu.pipeline_mode<synchronous>, transform_indices = @transform_1, window_bounds = array<i64: 8, 72>}, {pipeline_mode = #tpu.pipeline_mode<synchronous>, transform_indices = @transform_2, window_bounds = array<i64: 8, 1>}, {pipeline_mode = #tpu.pipeline_mode<synchronous>, transform_indices = @transform_3, window_bounds = array<i64: 2, 8, 384>}]} {
    %c0 = arith.constant 0 : index
    %c0_0 = arith.constant 0 : index
    %c0_1 = arith.constant 0 : index
    %0 = vector.load %arg1[%c0, %c0_0, %c0_1] : memref<2x8x432xf32, #tpu.memory_space<vmem>>, vector<1x8x384xf32>
    %1 = vector.shape_cast %0 : vector<1x8x384xf32> to vector<8x384xf32>
    %c0_2 = arith.constant 0 : index
    %c0_3 = arith.constant 0 : index
    %2 = vector.load %arg5[%c0_2, %c0_3] : memref<72x768xf32, #tpu.memory_space<vmem>>, vector<8x384xf32>
    tpu.vector_store %arg5[%c0_2, %c0_3], %1 {strides = array<i32>} : memref<72x768xf32, #tpu.memory_space<vmem>>, vector<8x384xf32>,
    %c0_4 = arith.constant 0 : index
    %c0_5 = arith.constant 0 : index
    %c1 = arith.constant 1 : index
    %3 = vector.load %arg1[%c0_4, %c0_5, %c1] : memref<2x8x432xf32, #tpu.memory_space<vmem>>, vector<1x8x384xf32>
    %4 = vector.shape_cast %3 : vector<1x8x384xf32> to vector<8x384xf32>
    %c8 = arith.constant 8 : index
    %c0_6 = arith.constant 0 : index
    %5 = vector.load %arg5[%c8, %c0_6] : memref<72x768xf32, #tpu.memory_space<vmem>>, vector<8x384xf32>
    tpu.vector_store %arg5[%c8, %c0_6], %4 {strides = array<i32>} : memref<72x768xf32, #tpu.memory_space<vmem>>, vector<8x384xf32>,
    %c0_7 = arith.constant 0 : index
    %c0_8 = arith.constant 0 : index
    %c2 = arith.constant 2 : index
    %6 = vector.load %arg1[%c0_7, %c0_8, %c2] : memref<2x8x432xf32, #tpu.memory_space<vmem>>, vector<1x8x384xf32>
    %7 = vector.shape_cast %6 : vector<1x8x384xf32> to vector<8x384xf32>
    %c16 = arith.constant 16 : index
    %c0_9 = arith.constant 0 : index
    %8 = vector.load %arg5[%c16, %c0_9] : memref<72x768xf32, #tpu.memory_space<vmem>>, vector<8x384xf32>
    tpu.vector_store %arg5[%c16, %c0_9], %7 {strides = array<i32>} : memref<72x768xf32, #tpu.memory_space<vmem>>, vector<8x384xf32>,
    %c0_10 = arith.constant 0 : index
    %c0_11 = arith.constant 0 : index
    %c18 = arith.constant 18 : index
    %9 = vector.load %arg1[%c0_10, %c0_11, %c18] : memref<2x8x432xf32, #tpu.memory_space<vmem>>, vector<1x8x384xf32>
    %10 = vector.shape_cast %9 : vector<1x8x384xf32> to vector<8x384xf32>
    %c24 = arith.constant 24 : index
    %c0_12 = arith.constant 0 : index
    %11 = vector.load %arg5[%c24, %c0_12] : memref<72x768xf32, #tpu.memory_space<vmem>>, vector<8x384xf32>
    tpu.vector_store %arg5[%c24, %c0_12], %10 {strides = array<i32>} : memref<72x768xf32, #tpu.memory_space<vmem>>, vector<8x384xf32>,
    %c0_13 = arith.constant 0 : index
    %c0_14 = arith.constant 0 : index
    %c19 = arith.constant 19 : index
    %12 = vector.load %arg1[%c0_13, %c0_14, %c19] : memref<2x8x432xf32, #tpu.memory_space<vmem>>, vector<1x8x384xf32>
    %13 = vector.shape_cast %12 : vector<1x8x384xf32> to vector<8x384xf32>
    %c32 = arith.constant 32 : index
    %c0_15 = arith.constant 0 : index
    %14 = vector.load %arg5[%c32, %c0_15] : memref<72x768xf32, #tpu.memory_space<vmem>>, vector<8x384xf32>
    tpu.vector_store %arg5[%c32, %c0_15], %13 {strides = array<i32>} : memref<72x768xf32, #tpu.memory_space<vmem>>, vector<8x384xf32>,
    %c0_16 = arith.constant 0 : index
    %c0_17 = arith.constant 0 : index
    %c20 = arith.constant 20 : index
    %15 = vector.load %arg1[%c0_16, %c0_17, %c20] : memref<2x8x432xf32, #tpu.memory_space<vmem>>, vector<1x8x384xf32>
    %16 = vector.shape_cast %15 : vector<1x8x384xf32> to vector<8x384xf32>
    %c40 = arith.constant 40 : index
    %c0_18 = arith.constant 0 : index
    %17 = vector.load %arg5[%c40, %c0_18] : memref<72x768xf32, #tpu.memory_space<vmem>>, vector<8x384xf32>
    tpu.vector_store %arg5[%c40, %c0_18], %16 {strides = array<i32>} : memref<72x768xf32, #tpu.memory_space<vmem>>, vector<8x384xf32>,
    %c0_19 = arith.constant 0 : index
    %c0_20 = arith.constant 0 : index
    %c36 = arith.constant 36 : index
    %18 = vector.load %arg1[%c0_19, %c0_20, %c36] : memref<2x8x432xf32, #tpu.memory_space<vmem>>, vector<1x8x384xf32>
    %19 = vector.shape_cast %18 : vector<1x8x384xf32> to vector<8x384xf32>
    %c48 = arith.constant 48 : index
    %c0_21 = arith.constant 0 : index
    %20 = vector.load %arg5[%c48, %c0_21] : memref<72x768xf32, #tpu.memory_space<vmem>>, vector<8x384xf32>
    tpu.vector_store %arg5[%c48, %c0_21], %19 {strides = array<i32>} : memref<72x768xf32, #tpu.memory_space<vmem>>, vector<8x384xf32>,
    %c0_22 = arith.constant 0 : index
    %c0_23 = arith.constant 0 : index
    %c37 = arith.constant 37 : index
    %21 = vector.load %arg1[%c0_22, %c0_23, %c37] : memref<2x8x432xf32, #tpu.memory_space<vmem>>, vector<1x8x384xf32>
    %22 = vector.shape_cast %21 : vector<1x8x384xf32> to vector<8x384xf32>
    %c56 = arith.constant 56 : index
    %c0_24 = arith.constant 0 : index
    %23 = vector.load %arg5[%c56, %c0_24] : memref<72x768xf32, #tpu.memory_space<vmem>>, vector<8x384xf32>
    tpu.vector_store %arg5[%c56, %c0_24], %22 {strides = array<i32>} : memref<72x768xf32, #tpu.memory_space<vmem>>, vector<8x384xf32>,
    %c0_25 = arith.constant 0 : index
    %c0_26 = arith.constant 0 : index
    %c38 = arith.constant 38 : index
    %24 = vector.load %arg1[%c0_25, %c0_26, %c38] : memref<2x8x432xf32, #tpu.memory_space<vmem>>, vector<1x8x384xf32>
    %25 = vector.shape_cast %24 : vector<1x8x384xf32> to vector<8x384xf32>
    %c64 = arith.constant 64 : index
    %c0_27 = arith.constant 0 : index
    %26 = vector.load %arg5[%c64, %c0_27] : memref<72x768xf32, #tpu.memory_space<vmem>>, vector<8x384xf32>
    tpu.vector_store %arg5[%c64, %c0_27], %25 {strides = array<i32>} : memref<72x768xf32, #tpu.memory_space<vmem>>, vector<8x384xf32>,
    %c1_28 = arith.constant 1 : index
    %c0_29 = arith.constant 0 : index
    %c0_30 = arith.constant 0 : index
    %27 = vector.load %arg1[%c1_28, %c0_29, %c0_30] : memref<2x8x432xf32, #tpu.memory_space<vmem>>, vector<1x8x384xf32>
    %28 = vector.shape_cast %27 : vector<1x8x384xf32> to vector<8x384xf32>
    %c0_31 = arith.constant 0 : index
    %c384 = arith.constant 384 : index
    %29 = vector.load %arg5[%c0_31, %c384] : memref<72x768xf32, #tpu.memory_space<vmem>>, vector<8x384xf32>
    tpu.vector_store %arg5[%c0_31, %c384], %28 {strides = array<i32>} : memref<72x768xf32, #tpu.memory_space<vmem>>, vector<8x384xf32>,
    %c1_32 = arith.constant 1 : index
    %c0_33 = arith.constant 0 : index
    %c1_34 = arith.constant 1 : index
    %30 = vector.load %arg1[%c1_32, %c0_33, %c1_34] : memref<2x8x432xf32, #tpu.memory_space<vmem>>, vector<1x8x384xf32>
    %31 = vector.shape_cast %30 : vector<1x8x384xf32> to vector<8x384xf32>
    %c8_35 = arith.constant 8 : index
    %c384_36 = arith.constant 384 : index
    %32 = vector.load %arg5[%c8_35, %c384_36] : memref<72x768xf32, #tpu.memory_space<vmem>>, vector<8x384xf32>
    tpu.vector_store %arg5[%c8_35, %c384_36], %31 {strides = array<i32>} : memref<72x768xf32, #tpu.memory_space<vmem>>, vector<8x384xf32>,
    %c1_37 = arith.constant 1 : index
    %c0_38 = arith.constant 0 : index
    %c2_39 = arith.constant 2 : index
    %33 = vector.load %arg1[%c1_37, %c0_38, %c2_39] : memref<2x8x432xf32, #tpu.memory_space<vmem>>, vector<1x8x384xf32>
    %34 = vector.shape_cast %33 : vector<1x8x384xf32> to vector<8x384xf32>
    %c16_40 = arith.constant 16 : index
    %c384_41 = arith.constant 384 : index
    %35 = vector.load %arg5[%c16_40, %c384_41] : memref<72x768xf32, #tpu.memory_space<vmem>>, vector<8x384xf32>
    tpu.vector_store %arg5[%c16_40, %c384_41], %34 {strides = array<i32>} : memref<72x768xf32, #tpu.memory_space<vmem>>, vector<8x384xf32>,
    %c1_42 = arith.constant 1 : index
    %c0_43 = arith.constant 0 : index
    %c18_44 = arith.constant 18 : index
    %36 = vector.load %arg1[%c1_42, %c0_43, %c18_44] : memref<2x8x432xf32, #tpu.memory_space<vmem>>, vector<1x8x384xf32>
    %37 = vector.shape_cast %36 : vector<1x8x384xf32> to vector<8x384xf32>
    %c24_45 = arith.constant 24 : index
    %c384_46 = arith.constant 384 : index
    %38 = vector.load %arg5[%c24_45, %c384_46] : memref<72x768xf32, #tpu.memory_space<vmem>>, vector<8x384xf32>
    tpu.vector_store %arg5[%c24_45, %c384_46], %37 {strides = array<i32>} : memref<72x768xf32, #tpu.memory_space<vmem>>, vector<8x384xf32>,
    %c1_47 = arith.constant 1 : index
    %c0_48 = arith.constant 0 : index
    %c19_49 = arith.constant 19 : index
    %39 = vector.load %arg1[%c1_47, %c0_48, %c19_49] : memref<2x8x432xf32, #tpu.memory_space<vmem>>, vector<1x8x384xf32>
    %40 = vector.shape_cast %39 : vector<1x8x384xf32> to vector<8x384xf32>
    %c32_50 = arith.constant 32 : index
    %c384_51 = arith.constant 384 : index
    %41 = vector.load %arg5[%c32_50, %c384_51] : memref<72x768xf32, #tpu.memory_space<vmem>>, vector<8x384xf32>
    tpu.vector_store %arg5[%c32_50, %c384_51], %40 {strides = array<i32>} : memref<72x768xf32, #tpu.memory_space<vmem>>, vector<8x384xf32>,
    %c1_52 = arith.constant 1 : index
    %c0_53 = arith.constant 0 : index
    %c20_54 = arith.constant 20 : index
    %42 = vector.load %arg1[%c1_52, %c0_53, %c20_54] : memref<2x8x432xf32, #tpu.memory_space<vmem>>, vector<1x8x384xf32>
    %43 = vector.shape_cast %42 : vector<1x8x384xf32> to vector<8x384xf32>
    %c40_55 = arith.constant 40 : index
    %c384_56 = arith.constant 384 : index
    %44 = vector.load %arg5[%c40_55, %c384_56] : memref<72x768xf32, #tpu.memory_space<vmem>>, vector<8x384xf32>
    tpu.vector_store %arg5[%c40_55, %c384_56], %43 {strides = array<i32>} : memref<72x768xf32, #tpu.memory_space<vmem>>, vector<8x384xf32>,
    %c1_57 = arith.constant 1 : index
    %c0_58 = arith.constant 0 : index
    %c36_59 = arith.constant 36 : index
    %45 = vector.load %arg1[%c1_57, %c0_58, %c36_59] : memref<2x8x432xf32, #tpu.memory_space<vmem>>, vector<1x8x384xf32>
    %46 = vector.shape_cast %45 : vector<1x8x384xf32> to vector<8x384xf32>
    %c48_60 = arith.constant 48 : index
    %c384_61 = arith.constant 384 : index
    %47 = vector.load %arg5[%c48_60, %c384_61] : memref<72x768xf32, #tpu.memory_space<vmem>>, vector<8x384xf32>
    tpu.vector_store %arg5[%c48_60, %c384_61], %46 {strides = array<i32>} : memref<72x768xf32, #tpu.memory_space<vmem>>, vector<8x384xf32>,
    %c1_62 = arith.constant 1 : index
    %c0_63 = arith.constant 0 : index
    %c37_64 = arith.constant 37 : index
    %48 = vector.load %arg1[%c1_62, %c0_63, %c37_64] : memref<2x8x432xf32, #tpu.memory_space<vmem>>, vector<1x8x384xf32>
    %49 = vector.shape_cast %48 : vector<1x8x384xf32> to vector<8x384xf32>
    %c56_65 = arith.constant 56 : index
    %c384_66 = arith.constant 384 : index
    %50 = vector.load %arg5[%c56_65, %c384_66] : memref<72x768xf32, #tpu.memory_space<vmem>>, vector<8x384xf32>
    tpu.vector_store %arg5[%c56_65, %c384_66], %49 {strides = array<i32>} : memref<72x768xf32, #tpu.memory_space<vmem>>, vector<8x384xf32>,
    %c1_67 = arith.constant 1 : index
    %c0_68 = arith.constant 0 : index
    %c38_69 = arith.constant 38 : index
    %51 = vector.load %arg1[%c1_67, %c0_68, %c38_69] : memref<2x8x432xf32, #tpu.memory_space<vmem>>, vector<1x8x384xf32>
    %52 = vector.shape_cast %51 : vector<1x8x384xf32> to vector<8x384xf32>
    %c64_70 = arith.constant 64 : index
    %c384_71 = arith.constant 384 : index
    %53 = vector.load %arg5[%c64_70, %c384_71] : memref<72x768xf32, #tpu.memory_space<vmem>>, vector<8x384xf32>
    tpu.vector_store %arg5[%c64_70, %c384_71], %52 {strides = array<i32>} : memref<72x768xf32, #tpu.memory_space<vmem>>, vector<8x384xf32>,
    %c0_72 = arith.constant 0 : index
    %c0_73 = arith.constant 0 : index
    %54 = vector.load %arg2[%c0_72, %c0_73] : memref<8x72xf32, #tpu.memory_space<vmem>>, vector<8x72xf32>
    %c0_74 = arith.constant 0 : index
    %c0_75 = arith.constant 0 : index
    %55 = vector.load %arg5[%c0_74, %c0_75] : memref<72x768xf32, #tpu.memory_space<vmem>>, vector<72x768xf32>
    %cst = arith.constant dense<0.000000e+00> : vector<8x768xf32>
    %56 = tpu.matmul %54, %55, %cst {dimension_numbers = #tpu.dot_dimension_numbers<[1], [0], [0], [1], [0, 0, 1, 1], [], []>} : vector<8x72xf32>, vector<72x768xf32>, vector<8x768xf32> -> vector<8x768xf32>
    %c0_76 = arith.constant 0 : index
    %c0_77 = arith.constant 0 : index
    %57 = vector.load %arg3[%c0_76, %c0_77] : memref<8x1xf32, #tpu.memory_space<vmem>>, vector<8x1xf32>
    %58 = vector.broadcast %57 : vector<8x1xf32> to vector<8x768xf32>
    %59 = arith.addf %56, %58 : vector<8x768xf32>
    %60 = vector.extract_strided_slice %59 {offsets = [0, 0], sizes = [8, 384], strides = [1, 1]} : vector<8x768xf32> to vector<8x384xf32>
    %c0_78 = arith.constant 0 : index
    %c0_79 = arith.constant 0 : index
    %c0_80 = arith.constant 0 : index
    %61 = vector.load %arg4[%c0_78, %c0_79, %c0_80] : memref<2x8x384xf32, #tpu.memory_space<vmem>>, vector<1x8x384xf32>
    %62 = vector.shape_cast %61 : vector<1x8x384xf32> to vector<8x384xf32>
    %63 = vector.shape_cast %60 : vector<8x384xf32> to vector<1x8x384xf32>
    tpu.vector_store %arg4[%c0_78, %c0_79, %c0_80], %63 {strides = array<i32>} : memref<2x8x384xf32, #tpu.memory_space<vmem>>, vector<1x8x384xf32>,
    %64 = vector.extract_strided_slice %59 {offsets = [0, 384], sizes = [8, 384], strides = [1, 1]} : vector<8x768xf32> to vector<8x384xf32>
    %c1_81 = arith.constant 1 : index
    %c0_82 = arith.constant 0 : index
    %c0_83 = arith.constant 0 : index
    %65 = vector.load %arg4[%c1_81, %c0_82, %c0_83] : memref<2x8x384xf32, #tpu.memory_space<vmem>>, vector<1x8x384xf32>
    %66 = vector.shape_cast %65 : vector<1x8x384xf32> to vector<8x384xf32>
    %67 = vector.shape_cast %64 : vector<8x384xf32> to vector<1x8x384xf32>
    tpu.vector_store %arg4[%c1_81, %c0_82, %c0_83], %67 {strides = array<i32>} : memref<2x8x384xf32, #tpu.memory_space<vmem>>, vector<1x8x384xf32>,
    return
  }
  func.func @transform_0(%arg0: i32) -> (i32, i32, i32) {
    %c0_i32 = arith.constant 0 : i32
    %c0_i32_0 = arith.constant 0 : i32
    %c0_i32_1 = arith.constant 0 : i32
    %c0_i32_2 = arith.constant 0 : i32
    return %c0_i32, %c0_i32_0, %c0_i32_1 : i32, i32, i32
  }
  func.func @transform_1(%arg0: i32) -> (i32, i32) {
    %c0_i32 = arith.constant 0 : i32
    %c0_i32_0 = arith.constant 0 : i32
    %c0_i32_1 = arith.constant 0 : i32
    return %c0_i32, %c0_i32_0 : i32, i32
  }
  func.func @transform_2(%arg0: i32) -> (i32, i32) {
    %c0_i32 = arith.constant 0 : i32
    %c0_i32_0 = arith.constant 0 : i32
    %c0_i32_1 = arith.constant 0 : i32
    return %c0_i32, %c0_i32_0 : i32, i32
  }
  func.func @transform_3(%arg0: i32) -> (i32, i32, i32) {
    %c0_i32 = arith.constant 0 : i32
    %c0_i32_0 = arith.constant 0 : i32
    %c0_i32_1 = arith.constant 0 : i32
    %c0_i32_2 = arith.constant 0 : i32
    return %c0_i32, %c0_i32_0, %c0_i32_1 : i32, i32, i32
  }
}

</mosaic_0001>

<llo_original>
// kernel: conv2d_same_padding.1
$region0: #{conv2d_same_padding.1}
  #allocation0 [shape = 'u32[]', space=smem, size = 0x4, offset = 0x4, fixed_abs, tag = 'smem constant byte address 0x4 - core index']
  #allocation1 [shape = 'u32[144,128]{1,0:T(1,128)}', space=vmem, size = 0x12000, scoped, tag = 'internal scratch']
  #allocation2 [shape = 'f32[72,768]{1,0:T(8,128)}', space=vmem, size = 0x36000, scoped, tag = 'scratch operand']
  %s0 = inlined_call_operand.vmem [shape: f32[2,8,432], index: 0, kind: input, shape index: {}]
  %s1 = inlined_call_operand.vmem [shape: f32[8,72], index: 1, kind: input, shape index: {}]
  %s2 = inlined_call_operand.vmem [shape: f32[8,1], index: 2, kind: input, shape index: {}]
  %s3 = inlined_call_operand.vmem [shape: f32[2,8,384], index: 3, kind: output, shape index: {}]
  %s4 = sld [smem:[#allocation0]]
  $region22: #{conv2d_same_padding.1} parent=0
    _
  %s6 = ssub.s32 1, %s4
  %s7 = scalar_select 0, %s6, %s4
  // Predicated region
  $region2: #{conv2d_same_padding.1} parent=0 // pred_check
    _
  $region3: #{conv2d_same_padding.1} parent=0 // pred_check_branch
    %9 = sbr.rel (0) target = $region5
  $region4: #{conv2d_same_padding.1} parent=0 // pred_region
    _
  $region5: #{conv2d_same_padding.1} parent=0 // pred_fallthru
    _
  // Predicated region
  $region6: #{conv2d_same_padding.1} parent=0 // pred_check
    _
  $region7: #{conv2d_same_padding.1} parent=0 // pred_check_branch
    %11 = sbr.rel (0) target = $region9
  $region8: #{conv2d_same_padding.1} parent=0 // pred_region
    _
  $region9: #{conv2d_same_padding.1} parent=0 // pred_fallthru
    _
  // Predicated region
  $region10: #{conv2d_same_padding.1} parent=0 // pred_check
    _
  $region11: #{conv2d_same_padding.1} parent=0 // pred_check_branch
    %13 = sbr.rel (0) target = $region13
  $region12: #{conv2d_same_padding.1} parent=0 // pred_region
    _
  $region13: #{conv2d_same_padding.1} parent=0 // pred_fallthru
    _
  %v14 = vld [vmem:[%s0] sm:$0xff]
  %v15 = vld [vmem:[%s0 + $0x8] sm:$0xff]
  %v16 = vld [vmem:[%s0 + $0x10] sm:$0xff]
  %17 = vst [vmem:[#allocation2] sm:$0xff] %v14
  %18 = vst [vmem:[#allocation2 + $0x8] sm:$0xff] %v15
  %19 = vst [vmem:[#allocation2 + $0x10] sm:$0xff] %v16
  %v20 = vld [vmem:[%s0] sm:$0xff]
  %v21 = vld [vmem:[%s0 + $0x8] sm:$0xff]
  %v22 = vld [vmem:[%s0 + $0x10] sm:$0xff]
  %v23 = vld [vmem:[%s0 + $0x18] sm:$0xff]
  %28 = vrot.lane.b32.xlu0 %v20, 127
  %v29 = vpop.permute.xlu0 %28
  %30 = vrot.lane.b32.xlu0 %v21, 127
  %v31 = vpop.permute.xlu0 %30
  %32 = vrot.lane.b32.xlu0 %v22, 127
  %v33 = vpop.permute.xlu0 %32
  %34 = vrot.lane.b32.xlu0 %v23, 127
  %v35 = vpop.permute.xlu0 %34
  %vm36 = vcmask 1039360
  %v37 = vsel %vm36, %v29, %v31
  %v38 = vsel %vm36, %v31, %v33
  %v39 = vsel %vm36, %v33, %v35
  %43 = vst [vmem:[#allocation2 + $0x30] sm:$0xff] %v37
  %44 = vst [vmem:[#allocation2 + $0x38] sm:$0xff] %v38
  %45 = vst [vmem:[#allocation2 + $0x40] sm:$0xff] %v39
  %v46 = vld [vmem:[%s0] sm:$0xff]
  %v47 = vld [vmem:[%s0 + $0x8] sm:$0xff]
  %v48 = vld [vmem:[%s0 + $0x10] sm:$0xff]
  %v49 = vld [vmem:[%s0 + $0x18] sm:$0xff]
  %54 = vrot.lane.b32.xlu0 %v46, 126
  %v55 = vpop.permute.xlu0 %54
  %56 = vrot.lane.b32.xlu0 %v47, 126
  %v57 = vpop.permute.xlu0 %56
  %58 = vrot.lane.b32.xlu0 %v48, 126
  %v59 = vpop.permute.xlu0 %58
  %60 = vrot.lane.b32.xlu0 %v49, 126
  %v61 = vpop.permute.xlu0 %60
  %vm62 = vcmask 1031168
  %v63 = vsel %vm62, %v55, %v57
  %v64 = vsel %vm62, %v57, %v59
  %v65 = vsel %vm62, %v59, %v61
  %69 = vst [vmem:[#allocation2 + $0x60] sm:$0xff] %v63
  %70 = vst [vmem:[#allocation2 + $0x68] sm:$0xff] %v64
  %71 = vst [vmem:[#allocation2 + $0x70] sm:$0xff] %v65
  %v72 = vld [vmem:[%s0] sm:$0xff]
  %v73 = vld [vmem:[%s0 + $0x8] sm:$0xff]
  %v74 = vld [vmem:[%s0 + $0x10] sm:$0xff]
  %v75 = vld [vmem:[%s0 + $0x18] sm:$0xff]
  %80 = vrot.lane.b32.xlu0 %v72, 110
  %v81 = vpop.permute.xlu0 %80
  %82 = vrot.lane.b32.xlu0 %v73, 110
  %v83 = vpop.permute.xlu0 %82
  %84 = vrot.lane.b32.xlu0 %v74, 110
  %v85 = vpop.permute.xlu0 %84
  %86 = vrot.lane.b32.xlu0 %v75, 110
  %v87 = vpop.permute.xlu0 %86
  %vm88 = vcmask 900096
  %v89 = vsel %vm88, %v81, %v83
  %v90 = vsel %vm88, %v83, %v85
  %v91 = vsel %vm88, %v85, %v87
  %95 = vst [vmem:[#allocation2 + $0x90] sm:$0xff] %v89
  %96 = vst [vmem:[#allocation2 + $0x98] sm:$0xff] %v90
  %97 = vst [vmem:[#allocation2 + $0xa0] sm:$0xff] %v91
  %v98 = vld [vmem:[%s0] sm:$0xff]
  %v99 = vld [vmem:[%s0 + $0x8] sm:$0xff]
  %v100 = vld [vmem:[%s0 + $0x10] sm:$0xff]
  %v101 = vld [vmem:[%s0 + $0x18] sm:$0xff]
  %106 = vrot.lane.b32.xlu0 %v98, 109
  %v107 = vpop.permute.xlu0 %106
  %108 = vrot.lane.b32.xlu0 %v99, 109
  %v109 = vpop.permute.xlu0 %108
  %110 = vrot.lane.b32.xlu0 %v100, 109
  %v111 = vpop.permute.xlu0 %110
  %112 = vrot.lane.b32.xlu0 %v101, 109
  %v113 = vpop.permute.xlu0 %112
  %vm114 = vcmask 891904
  %v115 = vsel %vm114, %v107, %v109
  %v116 = vsel %vm114, %v109, %v111
  %v117 = vsel %vm114, %v111, %v113
  %121 = vst [vmem:[#allocation2 + $0xc0] sm:$0xff] %v115
  %122 = vst [vmem:[#allocation2 + $0xc8] sm:$0xff] %v116
  %123 = vst [vmem:[#allocation2 + $0xd0] sm:$0xff] %v117
  %v124 = vld [vmem:[%s0] sm:$0xff]
  %v125 = vld [vmem:[%s0 + $0x8] sm:$0xff]
  %v126 = vld [vmem:[%s0 + $0x10] sm:$0xff]
  %v127 = vld [vmem:[%s0 + $0x18] sm:$0xff]
  %132 = vrot.lane.b32.xlu0 %v124, 108
  %v133 = vpop.permute.xlu0 %132
  %134 = vrot.lane.b32.xlu0 %v125, 108
  %v135 = vpop.permute.xlu0 %134
  %136 = vrot.lane.b32.xlu0 %v126, 108
  %v137 = vpop.permute.xlu0 %136
  %138 = vrot.lane.b32.xlu0 %v127, 108
  %v139 = vpop.permute.xlu0 %138
  %vm140 = vcmask 883712
  %v141 = vsel %vm140, %v133, %v135
  %v142 = vsel %vm140, %v135, %v137
  %v143 = vsel %vm140, %v137, %v139
  %147 = vst [vmem:[#allocation2 + $0xf0] sm:$0xff] %v141
  %148 = vst [vmem:[#allocation2 + $0xf8] sm:$0xff] %v142
  %149 = vst [vmem:[#allocation2 + $0x100] sm:$0xff] %v143
  %v150 = vld [vmem:[%s0] sm:$0xff]
  %v151 = vld [vmem:[%s0 + $0x8] sm:$0xff]
  %v152 = vld [vmem:[%s0 + $0x10] sm:$0xff]
  %v153 = vld [vmem:[%s0 + $0x18] sm:$0xff]
  %158 = vrot.lane.b32.xlu0 %v150, 92
  %v159 = vpop.permute.xlu0 %158
  %160 = vrot.lane.b32.xlu0 %v151, 92
  %v161 = vpop.permute.xlu0 %160
  %162 = vrot.lane.b32.xlu0 %v152, 92
  %v163 = vpop.permute.xlu0 %162
  %164 = vrot.lane.b32.xlu0 %v153, 92
  %v165 = vpop.permute.xlu0 %164
  %vm166 = vcmask 752640
  %v167 = vsel %vm166, %v159, %v161
  %v168 = vsel %vm166, %v161, %v163
  %v169 = vsel %vm166, %v163, %v165
  %173 = vst [vmem:[#allocation2 + $0x120] sm:$0xff] %v167
  %174 = vst [vmem:[#allocation2 + $0x128] sm:$0xff] %v168
  %175 = vst [vmem:[#allocation2 + $0x130] sm:$0xff] %v169
  %v176 = vld [vmem:[%s0] sm:$0xff]
  %v177 = vld [vmem:[%s0 + $0x8] sm:$0xff]
  %v178 = vld [vmem:[%s0 + $0x10] sm:$0xff]
  %v179 = vld [vmem:[%s0 + $0x18] sm:$0xff]
  %184 = vrot.lane.b32.xlu0 %v176, 91
  %v185 = vpop.permute.xlu0 %184
  %186 = vrot.lane.b32.xlu0 %v177, 91
  %v187 = vpop.permute.xlu0 %186
  %188 = vrot.lane.b32.xlu0 %v178, 91
  %v189 = vpop.permute.xlu0 %188
  %190 = vrot.lane.b32.xlu0 %v179, 91
  %v191 = vpop.permute.xlu0 %190
  %vm192 = vcmask 744448
  %v193 = vsel %vm192, %v185, %v187
  %v194 = vsel %vm192, %v187, %v189
  %v195 = vsel %vm192, %v189, %v191
  %199 = vst [vmem:[#allocation2 + $0x150] sm:$0xff] %v193
  %200 = vst [vmem:[#allocation2 + $0x158] sm:$0xff] %v194
  %201 = vst [vmem:[#allocation2 + $0x160] sm:$0xff] %v195
  %v202 = vld [vmem:[%s0] sm:$0xff]
  %v203 = vld [vmem:[%s0 + $0x8] sm:$0xff]
  %v204 = vld [vmem:[%s0 + $0x10] sm:$0xff]
  %v205 = vld [vmem:[%s0 + $0x18] sm:$0xff]
  %210 = vrot.lane.b32.xlu0 %v202, 90
  %v211 = vpop.permute.xlu0 %210
  %212 = vrot.lane.b32.xlu0 %v203, 90
  %v213 = vpop.permute.xlu0 %212
  %214 = vrot.lane.b32.xlu0 %v204, 90
  %v215 = vpop.permute.xlu0 %214
  %216 = vrot.lane.b32.xlu0 %v205, 90
  %v217 = vpop.permute.xlu0 %216
  %vm218 = vcmask 736256
  %v219 = vsel %vm218, %v211, %v213
  %v220 = vsel %vm218, %v213, %v215
  %v221 = vsel %vm218, %v215, %v217
  %225 = vst [vmem:[#allocation2 + $0x180] sm:$0xff] %v219
  %226 = vst [vmem:[#allocation2 + $0x188] sm:$0xff] %v220
  %227 = vst [vmem:[#allocation2 + $0x190] sm:$0xff] %v221
  %s228 = scalar_lea.vmem %s0, 32
  %v229 = vld [vmem:[%s228] sm:$0xff]
  %v230 = vld [vmem:[%s228 + $0x8] sm:$0xff]
  %v231 = vld [vmem:[%s228 + $0x10] sm:$0xff]
  %232 = vst [vmem:[#allocation2 + $0x18] sm:$0xff] %v229
  %233 = vst [vmem:[#allocation2 + $0x20] sm:$0xff] %v230
  %234 = vst [vmem:[#allocation2 + $0x28] sm:$0xff] %v231
  %v235 = vld [vmem:[%s228] sm:$0xff]
  %v236 = vld [vmem:[%s228 + $0x8] sm:$0xff]
  %v237 = vld [vmem:[%s228 + $0x10] sm:$0xff]
  %v238 = vld [vmem:[%s228 + $0x18] sm:$0xff]
  %243 = vrot.lane.b32.xlu0 %v235, 127
  %v244 = vpop.permute.xlu0 %243
  %245 = vrot.lane.b32.xlu0 %v236, 127
  %v246 = vpop.permute.xlu0 %245
  %247 = vrot.lane.b32.xlu0 %v237, 127
  %v248 = vpop.permute.xlu0 %247
  %249 = vrot.lane.b32.xlu0 %v238, 127
  %v250 = vpop.permute.xlu0 %249
  %v251 = vsel %vm36, %v244, %v246
  %v252 = vsel %vm36, %v246, %v248
  %v253 = vsel %vm36, %v248, %v250
  %257 = vst [vmem:[#allocation2 + $0x48] sm:$0xff] %v251
  %258 = vst [vmem:[#allocation2 + $0x50] sm:$0xff] %v252
  %259 = vst [vmem:[#allocation2 + $0x58] sm:$0xff] %v253
  %v260 = vld [vmem:[%s228] sm:$0xff]
  %v261 = vld [vmem:[%s228 + $0x8] sm:$0xff]
  %v262 = vld [vmem:[%s228 + $0x10] sm:$0xff]
  %v263 = vld [vmem:[%s228 + $0x18] sm:$0xff]
  %268 = vrot.lane.b32.xlu0 %v260, 126
  %v269 = vpop.permute.xlu0 %268
  %270 = vrot.lane.b32.xlu0 %v261, 126
  %v271 = vpop.permute.xlu0 %270
  %272 = vrot.lane.b32.xlu0 %v262, 126
  %v273 = vpop.permute.xlu0 %272
  %274 = vrot.lane.b32.xlu0 %v263, 126
  %v275 = vpop.permute.xlu0 %274
  %v276 = vsel %vm62, %v269, %v271
  %v277 = vsel %vm62, %v271, %v273
  %v278 = vsel %vm62, %v273, %v275
  %282 = vst [vmem:[#allocation2 + $0x78] sm:$0xff] %v276
  %283 = vst [vmem:[#allocation2 + $0x80] sm:$0xff] %v277
  %284 = vst [vmem:[#allocation2 + $0x88] sm:$0xff] %v278
  %v285 = vld [vmem:[%s228] sm:$0xff]
  %v286 = vld [vmem:[%s228 + $0x8] sm:$0xff]
  %v287 = vld [vmem:[%s228 + $0x10] sm:$0xff]
  %v288 = vld [vmem:[%s228 + $0x18] sm:$0xff]
  %293 = vrot.lane.b32.xlu0 %v285, 110
  %v294 = vpop.permute.xlu0 %293
  %295 = vrot.lane.b32.xlu0 %v286, 110
  %v296 = vpop.permute.xlu0 %295
  %297 = vrot.lane.b32.xlu0 %v287, 110
  %v298 = vpop.permute.xlu0 %297
  %299 = vrot.lane.b32.xlu0 %v288, 110
  %v300 = vpop.permute.xlu0 %299
  %v301 = vsel %vm88, %v294, %v296
  %v302 = vsel %vm88, %v296, %v298
  %v303 = vsel %vm88, %v298, %v300
  %307 = vst [vmem:[#allocation2 + $0xa8] sm:$0xff] %v301
  %308 = vst [vmem:[#allocation2 + $0xb0] sm:$0xff] %v302
  %309 = vst [vmem:[#allocation2 + $0xb8] sm:$0xff] %v303
  %v310 = vld [vmem:[%s228] sm:$0xff]
  %v311 = vld [vmem:[%s228 + $0x8] sm:$0xff]
  %v312 = vld [vmem:[%s228 + $0x10] sm:$0xff]
  %v313 = vld [vmem:[%s228 + $0x18] sm:$0xff]
  %318 = vrot.lane.b32.xlu0 %v310, 109
  %v319 = vpop.permute.xlu0 %318
  %320 = vrot.lane.b32.xlu0 %v311, 109
  %v321 = vpop.permute.xlu0 %320
  %322 = vrot.lane.b32.xlu0 %v312, 109
  %v323 = vpop.permute.xlu0 %322
  %324 = vrot.lane.b32.xlu0 %v313, 109
  %v325 = vpop.permute.xlu0 %324
  %v326 = vsel %vm114, %v319, %v321
  %v327 = vsel %vm114, %v321, %v323
  %v328 = vsel %vm114, %v323, %v325
  %332 = vst [vmem:[#allocation2 + $0xd8] sm:$0xff] %v326
  %333 = vst [vmem:[#allocation2 + $0xe0] sm:$0xff] %v327
  %334 = vst [vmem:[#allocation2 + $0xe8] sm:$0xff] %v328
  %v335 = vld [vmem:[%s228] sm:$0xff]
  %v336 = vld [vmem:[%s228 + $0x8] sm:$0xff]
  %v337 = vld [vmem:[%s228 + $0x10] sm:$0xff]
  %v338 = vld [vmem:[%s228 + $0x18] sm:$0xff]
  %343 = vrot.lane.b32.xlu0 %v335, 108
  %v344 = vpop.permute.xlu0 %343
  %345 = vrot.lane.b32.xlu0 %v336, 108
  %v346 = vpop.permute.xlu0 %345
  %347 = vrot.lane.b32.xlu0 %v337, 108
  %v348 = vpop.permute.xlu0 %347
  %349 = vrot.lane.b32.xlu0 %v338, 108
  %v350 = vpop.permute.xlu0 %349
  %v351 = vsel %vm140, %v344, %v346
  %v352 = vsel %vm140, %v346, %v348
  %v353 = vsel %vm140, %v348, %v350
  %357 = vst [vmem:[#allocation2 + $0x108] sm:$0xff] %v351
  %358 = vst [vmem:[#allocation2 + $0x110] sm:$0xff] %v352
  %359 = vst [vmem:[#allocation2 + $0x118] sm:$0xff] %v353
  %v360 = vld [vmem:[%s228] sm:$0xff]
  %v361 = vld [vmem:[%s228 + $0x8] sm:$0xff]
  %v362 = vld [vmem:[%s228 + $0x10] sm:$0xff]
  %v363 = vld [vmem:[%s228 + $0x18] sm:$0xff]
  %368 = vrot.lane.b32.xlu0 %v360, 92
  %v369 = vpop.permute.xlu0 %368
  %370 = vrot.lane.b32.xlu0 %v361, 92
  %v371 = vpop.permute.xlu0 %370
  %372 = vrot.lane.b32.xlu0 %v362, 92
  %v373 = vpop.permute.xlu0 %372
  %374 = vrot.lane.b32.xlu0 %v363, 92
  %v375 = vpop.permute.xlu0 %374
  %v376 = vsel %vm166, %v369, %v371
  %v377 = vsel %vm166, %v371, %v373
  %v378 = vsel %vm166, %v373, %v375
  %382 = vst [vmem:[#allocation2 + $0x138] sm:$0xff] %v376
  %383 = vst [vmem:[#allocation2 + $0x140] sm:$0xff] %v377
  %384 = vst [vmem:[#allocation2 + $0x148] sm:$0xff] %v378
  %v385 = vld [vmem:[%s228] sm:$0xff]
  %v386 = vld [vmem:[%s228 + $0x8] sm:$0xff]
  %v387 = vld [vmem:[%s228 + $0x10] sm:$0xff]
  %v388 = vld [vmem:[%s228 + $0x18] sm:$0xff]
  %393 = vrot.lane.b32.xlu0 %v385, 91
  %v394 = vpop.permute.xlu0 %393
  %395 = vrot.lane.b32.xlu0 %v386, 91
  %v396 = vpop.permute.xlu0 %395
  %397 = vrot.lane.b32.xlu0 %v387, 91
  %v398 = vpop.permute.xlu0 %397
  %399 = vrot.lane.b32.xlu0 %v388, 91
  %v400 = vpop.permute.xlu0 %399
  %v401 = vsel %vm192, %v394, %v396
  %v402 = vsel %vm192, %v396, %v398
  %v403 = vsel %vm192, %v398, %v400
  %407 = vst [vmem:[#allocation2 + $0x168] sm:$0xff] %v401
  %408 = vst [vmem:[#allocation2 + $0x170] sm:$0xff] %v402
  %409 = vst [vmem:[#allocation2 + $0x178] sm:$0xff] %v403
  %v410 = vld [vmem:[%s228] sm:$0xff]
  %v411 = vld [vmem:[%s228 + $0x8] sm:$0xff]
  %v412 = vld [vmem:[%s228 + $0x10] sm:$0xff]
  %v413 = vld [vmem:[%s228 + $0x18] sm:$0xff]
  %418 = vrot.lane.b32.xlu0 %v410, 90
  %v419 = vpop.permute.xlu0 %418
  %420 = vrot.lane.b32.xlu0 %v411, 90
  %v421 = vpop.permute.xlu0 %420
  %422 = vrot.lane.b32.xlu0 %v412, 90
  %v423 = vpop.permute.xlu0 %422
  %424 = vrot.lane.b32.xlu0 %v413, 90
  %v425 = vpop.permute.xlu0 %424
  %v426 = vsel %vm218, %v419, %v421
  %v427 = vsel %vm218, %v421, %v423
  %v428 = vsel %vm218, %v423, %v425
  %432 = vst [vmem:[#allocation2 + $0x198] sm:$0xff] %v426
  %433 = vst [vmem:[#allocation2 + $0x1a0] sm:$0xff] %v427
  %434 = vst [vmem:[#allocation2 + $0x1a8] sm:$0xff] %v428
  %v435 = vld [vmem:[%s1] sm:$0xff]
  %v436 = vld [vmem:[#allocation2] sm:$0xff]
  %v437 = vld [vmem:[#allocation2 + $0x8] sm:$0xff]
  %v438 = vld [vmem:[#allocation2 + $0x10] sm:$0xff]
  %v439 = vld [vmem:[#allocation2 + $0x18] sm:$0xff]
  %v440 = vld [vmem:[#allocation2 + $0x20] sm:$0xff]
  %v441 = vld [vmem:[#allocation2 + $0x28] sm:$0xff]
  %v442 = vld [vmem:[#allocation2 + $0x30] sm:$0xff]
  %v443 = vld [vmem:[#allocation2 + $0x38] sm:$0xff]
  %v444 = vld [vmem:[#allocation2 + $0x40] sm:$0xff]
  %v445 = vld [vmem:[#allocation2 + $0x48] sm:$0xff]
  %v446 = vld [vmem:[#allocation2 + $0x50] sm:$0xff]
  %v447 = vld [vmem:[#allocation2 + $0x58] sm:$0xff]
  %v448 = vld [vmem:[#allocation2 + $0x60] sm:$0xff]
  %v449 = vld [vmem:[#allocation2 + $0x68] sm:$0xff]
  %v450 = vld [vmem:[#allocation2 + $0x70] sm:$0xff]
  %v451 = vld [vmem:[#allocation2 + $0x78] sm:$0xff]
  %v452 = vld [vmem:[#allocation2 + $0x80] sm:$0xff]
  %v453 = vld [vmem:[#allocation2 + $0x88] sm:$0xff]
  %v454 = vld [vmem:[#allocation2 + $0x90] sm:$0xff]
  %v455 = vld [vmem:[#allocation2 + $0x98] sm:$0xff]
  %v456 = vld [vmem:[#allocation2 + $0xa0] sm:$0xff]
  %v457 = vld [vmem:[#allocation2 + $0xa8] sm:$0xff]
  %v458 = vld [vmem:[#allocation2 + $0xb0] sm:$0xff]
  %v459 = vld [vmem:[#allocation2 + $0xb8] sm:$0xff]
  %v460 = vld [vmem:[#allocation2 + $0xc0] sm:$0xff]
  %v461 = vld [vmem:[#allocation2 + $0xc8] sm:$0xff]
  %v462 = vld [vmem:[#allocation2 + $0xd0] sm:$0xff]
  %v463 = vld [vmem:[#allocation2 + $0xd8] sm:$0xff]
  %v464 = vld [vmem:[#allocation2 + $0xe0] sm:$0xff]
  %v465 = vld [vmem:[#allocation2 + $0xe8] sm:$0xff]
  %v466 = vld [vmem:[#allocation2 + $0xf0] sm:$0xff]
  %v467 = vld [vmem:[#allocation2 + $0xf8] sm:$0xff]
  %v468 = vld [vmem:[#allocation2 + $0x100] sm:$0xff]
  %v469 = vld [vmem:[#allocation2 + $0x108] sm:$0xff]
  %v470 = vld [vmem:[#allocation2 + $0x110] sm:$0xff]
  %v471 = vld [vmem:[#allocation2 + $0x118] sm:$0xff]
  %v472 = vld [vmem:[#allocation2 + $0x120] sm:$0xff]
  %v473 = vld [vmem:[#allocation2 + $0x128] sm:$0xff]
  %v474 = vld [vmem:[#allocation2 + $0x130] sm:$0xff]
  %v475 = vld [vmem:[#allocation2 + $0x138] sm:$0xff]
  %v476 = vld [vmem:[#allocation2 + $0x140] sm:$0xff]
  %v477 = vld [vmem:[#allocation2 + $0x148] sm:$0xff]
  %v478 = vld [vmem:[#allocation2 + $0x150] sm:$0xff]
  %v479 = vld [vmem:[#allocation2 + $0x158] sm:$0xff]
  %v480 = vld [vmem:[#allocation2 + $0x160] sm:$0xff]
  %v481 = vld [vmem:[#allocation2 + $0x168] sm:$0xff]
  %v482 = vld [vmem:[#allocation2 + $0x170] sm:$0xff]
  %v483 = vld [vmem:[#allocation2 + $0x178] sm:$0xff]
  %v484 = vld [vmem:[#allocation2 + $0x180] sm:$0xff]
  %v485 = vld [vmem:[#allocation2 + $0x188] sm:$0xff]
  %v486 = vld [vmem:[#allocation2 + $0x190] sm:$0xff]
  %v487 = vld [vmem:[#allocation2 + $0x198] sm:$0xff]
  %v488 = vld [vmem:[#allocation2 + $0x1a0] sm:$0xff]
  %v489 = vld [vmem:[#allocation2 + $0x1a8] sm:$0xff]
  %v490 = vld [vmem:[%s2] sm:$0xff]
  %492 = vset.pattern.permute.xlu0 0
  %493 = vperm.xlu0 %492, %v490
  %v494 = vpop.permute.xlu0 %493
  %vm496 = vcmask 588800
  %v498 = vsel %vm496, %v435, 0
  %500 = vmatprep.subr.mxu0 %v437
  %501 = vmatpush1.msra.mxu0 %v436
  %502 = vmatprep.subr.mxu0 %v443
  %503 = vmatpush1.msra.mxu0 %v442
  %504 = vmatprep.subr.mxu0 %v449
  %505 = vmatpush1.msra.mxu0 %v448
  %506 = vmatprep.subr.mxu0 %v455
  %507 = vmatpush1.msra.mxu0 %v454
  %508 = vmatprep.subr.mxu0 %v461
  %509 = vmatpush1.msra.mxu0 %v460
  %510 = vmatprep.subr.mxu0 %v467
  %511 = vmatpush1.msra.mxu0 %v466
  %512 = vmatprep.subr.mxu0 %v473
  %513 = vmatpush1.msra.mxu0 %v472
  %514 = vmatprep.subr.mxu0 %v479
  %515 = vmatpush1.msra.mxu0 %v478
  %516 = vmatprep.subr.mxu0 %v485
  %517 = vmatpush1.msra.mxu0 %v484
  %518 = vmatprep.subr.mxu0 0.0
  %519 = vmatpush1.msra.mxu0 0.0
  %520 = vmatprep.subr.mxu0 0.0
  %521 = vmatpush1.msra.mxu0 0.0
  %522 = vmatprep.subr.mxu0 0.0
  %523 = vmatpush1.msra.mxu0 0.0
  %524 = vmatprep.subr.mxu0 0.0
  %525 = vmatpush1.msra.mxu0 0.0
  %526 = vmatprep.subr.mxu0 0.0
  %527 = vmatpush1.msra.mxu0 0.0
  %528 = vmatprep.subr.mxu0 0.0
  %529 = vmatpush1.msra.mxu0 0.0
  %530 = vmatprep.subr.mxu0 0.0
  %531 = vmatpush1.msra.mxu0 0.0
  %532 = vmatprep.subr.mxu0 0.0
  %533 = vmatpush1.msra.mxu0 0.0
  %534 = vmatprep.subr.mxu0 0.0
  %535 = vmatpush1.msra.mxu0 0.0
  %536 = vmatprep.subr.mxu0 0.0
  %537 = vmatpush1.msra.mxu0 0.0
  %538 = vmatprep.subr.mxu0 0.0
  %539 = vmatpush1.msra.mxu0 0.0
  %540 = vmatprep.subr.mxu0 0.0
  %541 = vmatpush1.msra.mxu0 0.0
  %542 = vmatprep.subr.mxu0 0.0
  %543 = vmatpush1.msra.mxu0 0.0
  %544 = vmatprep.subr.mxu0 0.0
  %545 = vmatpush1.msra.mxu0 0.0
  %546 = vmatprep.subr.mxu0 0.0
  %547 = vmatpush1.msra.mxu0 0.0
  %548 = vmatprep.subr.mxu0 0.0
  %549 = vmatpush1.msra.mxu0 0.0
  %550 = vmatprep.subr.mxu0 0.0
  %551 = vmatpush1.msra.mxu0 0.0
  %552 = vmatprep.subr.mxu0 0.0
  %553 = vmatpush1.msra.mxu0 0.0
  %554 = vmatprep.subr.mxu0 0.0
  %555 = vmatpush1.msra.mxu0 0.0
  %556 = vmatprep.subr.mxu0 0.0
  %557 = vmatpush1.msra.mxu0 0.0
  %558 = vmatprep.subr.mxu0 0.0
  %559 = vmatpush1.msra.mxu0 0.0
  %560 = vmatprep.subr.mxu0 0.0
  %561 = vmatpush1.msra.mxu0 0.0
  %562 = vmatprep.subr.mxu0 0.0
  %563 = vmatpush1.msra.mxu0 0.0
  %564 = vmatprep.mubr.f32.mxu0 0.0
  %565 = vmatmul.mubr.f32.gmra.mrb[0].mxu0 %v498
  %v566 = vpop.f32.mrb[0].mxu0
  %v567 = vadd.f32 %v494, %v566
  %v568 = vpop.f32.mrb[0].mxu0
  %v569 = vadd.f32 %v494, %v568
  %570 = vdwg.mxu0
  %571 = vmatprep.subr.mxu0 %v439
  %572 = vmatpush1.msra.mxu0 %v438
  %573 = vmatprep.subr.mxu0 %v445
  %574 = vmatpush1.msra.mxu0 %v444
  %575 = vmatprep.subr.mxu0 %v451
  %576 = vmatpush1.msra.mxu0 %v450
  %577 = vmatprep.subr.mxu0 %v457
  %578 = vmatpush1.msra.mxu0 %v456
  %579 = vmatprep.subr.mxu0 %v463
  %580 = vmatpush1.msra.mxu0 %v462
  %581 = vmatprep.subr.mxu0 %v469
  %582 = vmatpush1.msra.mxu0 %v468
  %583 = vmatprep.subr.mxu0 %v475
  %584 = vmatpush1.msra.mxu0 %v474
  %585 = vmatprep.subr.mxu0 %v481
  %586 = vmatpush1.msra.mxu0 %v480
  %587 = vmatprep.subr.mxu0 %v487
  %588 = vmatpush1.msra.mxu0 %v486
  %589 = vmatprep.subr.mxu0 0.0
  %590 = vmatpush1.msra.mxu0 0.0
  %591 = vmatprep.subr.mxu0 0.0
  %592 = vmatpush1.msra.mxu0 0.0
  %593 = vmatprep.subr.mxu0 0.0
  %594 = vmatpush1.msra.mxu0 0.0
  %595 = vmatprep.subr.mxu0 0.0
  %596 = vmatpush1.msra.mxu0 0.0
  %597 = vmatprep.subr.mxu0 0.0
  %598 = vmatpush1.msra.mxu0 0.0
  %599 = vmatprep.subr.mxu0 0.0
  %600 = vmatpush1.msra.mxu0 0.0
  %601 = vmatprep.subr.mxu0 0.0
  %602 = vmatpush1.msra.mxu0 0.0
  %603 = vmatprep.subr.mxu0 0.0
  %604 = vmatpush1.msra.mxu0 0.0
  %605 = vmatprep.subr.mxu0 0.0
  %606 = vmatpush1.msra.mxu0 0.0
  %607 = vmatprep.subr.mxu0 0.0
  %608 = vmatpush1.msra.mxu0 0.0
  %609 = vmatprep.subr.mxu0 0.0
  %610 = vmatpush1.msra.mxu0 0.0
  %611 = vmatprep.subr.mxu0 0.0
  %612 = vmatpush1.msra.mxu0 0.0
  %613 = vmatprep.subr.mxu0 0.0
  %614 = vmatpush1.msra.mxu0 0.0
  %615 = vmatprep.subr.mxu0 0.0
  %616 = vmatpush1.msra.mxu0 0.0
  %617 = vmatprep.subr.mxu0 0.0
  %618 = vmatpush1.msra.mxu0 0.0
  %619 = vmatprep.subr.mxu0 0.0
  %620 = vmatpush1.msra.mxu0 0.0
  %621 = vmatprep.subr.mxu0 0.0
  %622 = vmatpush1.msra.mxu0 0.0
  %623 = vmatprep.subr.mxu0 0.0
  %624 = vmatpush1.msra.mxu0 0.0
  %625 = vmatprep.subr.mxu0 0.0
  %626 = vmatpush1.msra.mxu0 0.0
  %627 = vmatprep.subr.mxu0 0.0
  %628 = vmatpush1.msra.mxu0 0.0
  %629 = vmatprep.subr.mxu0 0.0
  %630 = vmatpush1.msra.mxu0 0.0
  %631 = vmatprep.subr.mxu0 0.0
  %632 = vmatpush1.msra.mxu0 0.0
  %633 = vmatprep.subr.mxu0 0.0
  %634 = vmatpush1.msra.mxu0 0.0
  %635 = vmatprep.mubr.f32.mxu0 0.0
  %636 = vmatmul.mubr.f32.gmra.mrb[0].mxu0 %v498
  %v637 = vpop.f32.mrb[0].mxu0
  %v638 = vadd.f32 %v494, %v637
  %v639 = vpop.f32.mrb[0].mxu0
  %v640 = vadd.f32 %v494, %v639
  %641 = vdwg.mxu0
  %642 = vmatprep.subr.mxu0 %v441
  %643 = vmatpush1.msra.mxu0 %v440
  %644 = vmatprep.subr.mxu0 %v447
  %645 = vmatpush1.msra.mxu0 %v446
  %646 = vmatprep.subr.mxu0 %v453
  %647 = vmatpush1.msra.mxu0 %v452
  %648 = vmatprep.subr.mxu0 %v459
  %649 = vmatpush1.msra.mxu0 %v458
  %650 = vmatprep.subr.mxu0 %v465
  %651 = vmatpush1.msra.mxu0 %v464
  %652 = vmatprep.subr.mxu0 %v471
  %653 = vmatpush1.msra.mxu0 %v470
  %654 = vmatprep.subr.mxu0 %v477
  %655 = vmatpush1.msra.mxu0 %v476
  %656 = vmatprep.subr.mxu0 %v483
  %657 = vmatpush1.msra.mxu0 %v482
  %658 = vmatprep.subr.mxu0 %v489
  %659 = vmatpush1.msra.mxu0 %v488
  %660 = vmatprep.subr.mxu0 0.0
  %661 = vmatpush1.msra.mxu0 0.0
  %662 = vmatprep.subr.mxu0 0.0
  %663 = vmatpush1.msra.mxu0 0.0
  %664 = vmatprep.subr.mxu0 0.0
  %665 = vmatpush1.msra.mxu0 0.0
  %666 = vmatprep.subr.mxu0 0.0
  %667 = vmatpush1.msra.mxu0 0.0
  %668 = vmatprep.subr.mxu0 0.0
  %669 = vmatpush1.msra.mxu0 0.0
  %670 = vmatprep.subr.mxu0 0.0
  %671 = vmatpush1.msra.mxu0 0.0
  %672 = vmatprep.subr.mxu0 0.0
  %673 = vmatpush1.msra.mxu0 0.0
  %674 = vmatprep.subr.mxu0 0.0
  %675 = vmatpush1.msra.mxu0 0.0
  %676 = vmatprep.subr.mxu0 0.0
  %677 = vmatpush1.msra.mxu0 0.0
  %678 = vmatprep.subr.mxu0 0.0
  %679 = vmatpush1.msra.mxu0 0.0
  %680 = vmatprep.subr.mxu0 0.0
  %681 = vmatpush1.msra.mxu0 0.0
  %682 = vmatprep.subr.mxu0 0.0
  %683 = vmatpush1.msra.mxu0 0.0
  %684 = vmatprep.subr.mxu0 0.0
  %685 = vmatpush1.msra.mxu0 0.0
  %686 = vmatprep.subr.mxu0 0.0
  %687 = vmatpush1.msra.mxu0 0.0
  %688 = vmatprep.subr.mxu0 0.0
  %689 = vmatpush1.msra.mxu0 0.0
  %690 = vmatprep.subr.mxu0 0.0
  %691 = vmatpush1.msra.mxu0 0.0
  %692 = vmatprep.subr.mxu0 0.0
  %693 = vmatpush1.msra.mxu0 0.0
  %694 = vmatprep.subr.mxu0 0.0
  %695 = vmatpush1.msra.mxu0 0.0
  %696 = vmatprep.subr.mxu0 0.0
  %697 = vmatpush1.msra.mxu0 0.0
  %698 = vmatprep.subr.mxu0 0.0
  %699 = vmatpush1.msra.mxu0 0.0
  %700 = vmatprep.subr.mxu0 0.0
  %701 = vmatpush1.msra.mxu0 0.0
  %702 = vmatprep.subr.mxu0 0.0
  %703 = vmatpush1.msra.mxu0 0.0
  %704 = vmatprep.subr.mxu0 0.0
  %705 = vmatpush1.msra.mxu0 0.0
  %706 = vmatprep.mubr.f32.mxu0 0.0
  %707 = vmatmul.mubr.f32.gmra.mrb[0].mxu0 %v498
  %v708 = vpop.f32.mrb[0].mxu0
  %v709 = vadd.f32 %v494, %v708
  %v710 = vpop.f32.mrb[0].mxu0
  %v711 = vadd.f32 %v494, %v710
  %712 = vdwg.mxu0
  %713 = vst [vmem:[%s3] sm:$0xff] %v567
  %714 = vst [vmem:[%s3 + $0x8] sm:$0xff] %v569
  %715 = vst [vmem:[%s3 + $0x10] sm:$0xff] %v638
  %s716 = scalar_lea.vmem %s3, 24
  %717 = vst [vmem:[%s716] sm:$0xff] %v640
  %718 = vst [vmem:[%s716 + $0x8] sm:$0xff] %v709
  %719 = vst [vmem:[%s716 + $0x10] sm:$0xff] %v711
  // Predicated region
  $region14: #{conv2d_same_padding.1} parent=0 // pred_check
    _
  $region15: #{conv2d_same_padding.1} parent=0 // pred_check_branch
    %721 = sbr.rel (0) target = $region17
  $region16: #{conv2d_same_padding.1} parent=0 // pred_region
    _
  $region17: #{conv2d_same_padding.1} parent=0 // pred_fallthru
    _
  // Predicated region
  $region18: #{conv2d_same_padding.1} parent=0 // pred_check
    _
  $region19: #{conv2d_same_padding.1} parent=0 // pred_check_branch
    %723 = sbr.rel (0) target = $region21
  $region20: #{conv2d_same_padding.1} parent=0 // pred_region
    _
  $region21: #{conv2d_same_padding.1} parent=0 // pred_fallthru
    _

</llo_original>
